<compile_context>
chip_gen: v5e
topology: v5e:2x2
jax: 0.10.0
libtpu: 0.0.40
codegen_flags: <defaults>
</compile_context>

<pallas_src>
import jax
import jax.numpy as jnp
from jax.experimental import pallas as pl
from jax.experimental.pallas import tpu as pltpu


def _lambda_shortcut_kernel(x_ref, s_ref, o_ref):
    # x_ref: (B_TILE * C_in, H*W)      flattened input rows (lane-major)
    # s_ref: (H*W, Ho*Wo)              0/1 stride-2 selection matrix
    # o_ref: (B_TILE, C_out, Ho*Wo)    padded output block (lane-major)
    b_tile, c_out, howo = o_ref.shape
    c_in = x_ref.shape[0] // b_tile
    pad = (c_out - c_in) // 2

    # One MXU-shaped matmul does the whole stride-2 gather for every
    # (image, channel) row in the block.  Operands keep x.dtype; f32
    # accumulation is exact because S is 0/1.
    y = jnp.dot(x_ref[...], s_ref[...], preferred_element_type=jnp.float32)
    y = y.astype(o_ref.dtype)

    # Zero only the pad channel slabs (no full-block zero -> no double store
    # traffic for the copied channels).
    if pad > 0:
        zeros_pad = jnp.zeros((b_tile, pad, howo), o_ref.dtype)
        o_ref[:, :pad, :] = zeros_pad
        o_ref[:, pad + c_in:, :] = zeros_pad

    # Single reshaped store for all copied channels.  The reshape only splits
    # the leading (sublane-major) dim; the lane dim (Ho*Wo) is untouched, so
    # it is layout-preserving.
    o_ref[:, pad:pad + c_in, :] = y.reshape(b_tile, c_in, howo)


def _tpu_generation_info():
    """(physical VMEM bytes, #TensorCores heuristic, vmem_limit_bytes to use).

    v7x: 64 MiB VMEM per TC, 2 TCs/chip  -> cap scoped limit at 48 MiB.
    v5e/v6e: 128 MiB VMEM, 1 TC          -> allow 64 MiB scoped.
    Falls back to the conservative (v7x-like) settings if the query fails.
    """
    try:
        info = pltpu.get_tpu_info()
        phys = int(getattr(info, "vmem_capacity_bytes", 64 << 20))
    except Exception:
        phys = 64 << 20
    if phys <= (64 << 20):
        return phys, 2, 48 << 20
    return phys, 1, 64 << 20


def _pick_batch_tile(n, c, c_out, hw, howo, itemsize, vmem_budget, num_cores,
                     max_tile=None):
    """Largest divisor of n whose blocks (double-buffered, including the
    selection matrix S) fit in `vmem_budget` and whose input block is
    8-sublane aligned.  On 2-TensorCore parts, prefer an even number of >= 2
    grid steps so megacore sharding keeps both cores busy; on single-core
    parts just take the biggest fitting tile."""
    if max_tile is None:
        max_tile = n
    candidates = []
    for d in range(1, min(n, max_tile) + 1):
        if n % d:
            continue
        if (d * c) % 8 and d != n:
            continue
        # Double-buffer input block, output block AND the S matrix (Pallas
        # allocates 2 buffers for every input, even with a constant index).
        vmem = 2 * itemsize * (d * c * hw + d * c_out * howo + hw * howo)
        if vmem > vmem_budget:
            continue
        candidates.append(d)
    if not candidates:
        return 1
    if num_cores >= 2:
        even = [d for d in candidates if (n // d) >= 2 and (n // d) % 2 == 0]
        if even:
            return max(even)
        multi = [d for d in candidates if (n // d) >= 2]
        if multi:
            return max(multi)
    return max(candidates)


def lambda_layer(x, planes, *, max_batch_tile=None):
    """Pallas version of LambdaLayer wrapping the ResNet option-A shortcut.

    Equivalent to:
        F.pad(x[:, :, ::2, ::2], (0, 0, 0, 0, planes//4, planes//4), 'constant', 0)

    Assumes a floating-point dtype (as used in the chapter-6 ResNet).
    """
    n, c, h, w = x.shape
    pad = planes // 4
    c_out = c + 2 * pad
    ho, wo = (h + 1) // 2, (w + 1) // 2
    hw, howo = h * w, ho * wo

    itemsize = jnp.dtype(x.dtype).itemsize
    _, num_cores, vmem_limit = _tpu_generation_info()
    # Leave ~25% headroom under the scoped limit for compiler scratch.
    vmem_budget = (vmem_limit * 3) // 4
    b_tile = _pick_batch_tile(n, c, c_out, hw, howo, itemsize,
                              vmem_budget, num_cores, max_batch_tile)

    # Flat 0/1 selection matrix: S[k, m] == 1 iff flat input index k equals the
    # flat index of output pixel m under the stride-2 subsample.  Built once in
    # the wrapper (XLA), constant block index across grid steps.  Kept in
    # x.dtype so bf16 activations are not promoted to the slow f32 MXU path.
    sel = (2 * jnp.arange(ho)[:, None] * w + 2 * jnp.arange(wo)[None, :]).reshape(-1)
    s = (jnp.arange(hw)[:, None] == sel[None, :]).astype(x.dtype)

    # Lane-major layouts: last dims are H*W / Ho*Wo (layout plumbing, free).
    x_flat = x.reshape(n * c, hw)

    # Advisory cost for XLA scheduling around this mem-bound custom call.
    cost = pl.CostEstimate(
        flops=2 * (n * c) * hw * howo,
        transcendentals=0,
        bytes_accessed=itemsize * (n * c * hw + n * c_out * howo + hw * howo),
    )

    out_flat = pl.pallas_call(
        _lambda_shortcut_kernel,
        out_shape=jax.ShapeDtypeStruct((n, c_out, howo), x.dtype),
        grid=(n // b_tile,),
        in_specs=[
            pl.BlockSpec((b_tile * c, hw), lambda b: (b, 0)),
            # Constant operand: same block every step -> Pallas skips re-DMA.
            pl.BlockSpec((hw, howo), lambda b: (0, 0)),
        ],
        out_specs=pl.BlockSpec((b_tile, c_out, howo), lambda b: (b, 0, 0)),
        compiler_params=pltpu.CompilerParams(
            dimension_semantics=("parallel",),
            vmem_limit_bytes=vmem_limit,
        ),
        cost_estimate=cost,
    )(x_flat, s)

    return out_flat.reshape(n, c_out, ho, wo)


if __name__ == "__main__":
    key = jax.random.PRNGKey(0)
    # Canonical-style option-A shortcut shapes (small): pad = planes//4 = 8 is
    # 8-sublane aligned, so all kernel stores hit the aligned path.
    n, c, h, w = 4, 8, 16, 16
    planes = 32  # pad = 8 per side -> out channels = 24
    x = jax.random.normal(key, (n, c, h, w), dtype=jnp.float32)

    out = jax.block_until_ready(lambda_layer(x, planes))

    # Pure-JAX reference of the PyTorch lambda:
    #   F.pad(x[:, :, ::2, ::2], (0, 0, 0, 0, planes//4, planes//4), "constant", 0)
    ref = jnp.pad(
        x[:, :, ::2, ::2],
        ((0, 0), (planes // 4, planes // 4), (0, 0), (0, 0)),
    )
    assert out.shape == ref.shape, (out.shape, ref.shape)
    assert jnp.allclose(out, ref, rtol=1e-6, atol=1e-6), "mismatch vs reference"
    print("KERNEL_OK")
</pallas_src>

<mosaic_0001>
module attributes {stable_mosaic.version = 11 : i64} {
  func.func @_lambda_shortcut_kernel(%arg0: i32, %arg1: memref<16x256xf32, #tpu.memory_space<vmem>>, %arg2: memref<256x64xf32, #tpu.memory_space<vmem>>, %arg3: memref<2x24x64xf32, #tpu.memory_space<vmem>>) attributes {dimension_semantics = [#tpu.dimension_semantics<parallel>], iteration_bounds = array<i64: 2>, scalar_prefetch = 0 : i64, scratch_operands = 0 : i64, tpu.core_type = #tpu.core_type<tc>, window_params = [{transform_indices = @transform_0, window_bounds = array<i64: 16, 256>}, {pipeline_mode = #tpu.pipeline_mode<synchronous>, transform_indices = @transform_1, window_bounds = array<i64: 256, 64>}, {transform_indices = @transform_2, window_bounds = array<i64: 2, 24, 64>}]} {
    %c0 = arith.constant 0 : index
    %c0_0 = arith.constant 0 : index
    %0 = vector.load %arg1[%c0, %c0_0] : memref<16x256xf32, #tpu.memory_space<vmem>>, vector<16x256xf32>
    %c0_1 = arith.constant 0 : index
    %c0_2 = arith.constant 0 : index
    %1 = vector.load %arg2[%c0_1, %c0_2] : memref<256x64xf32, #tpu.memory_space<vmem>>, vector<256x64xf32>
    %cst = arith.constant dense<0.000000e+00> : vector<16x64xf32>
    %2 = tpu.matmul %0, %1, %cst {dimension_numbers = #tpu.dot_dimension_numbers<[1], [0], [0], [1], [0, 0, 1, 1], [], []>} : vector<16x256xf32>, vector<256x64xf32>, vector<16x64xf32> -> vector<16x64xf32>
    %cst_3 = arith.constant 0.000000e+00 : f32
    %3 = vector.broadcast %cst_3 : f32 to vector<2x8x64xf32>
    %c0_4 = arith.constant 0 : index
    %c0_5 = arith.constant 0 : index
    %c0_6 = arith.constant 0 : index
    %4 = vector.load %arg3[%c0_4, %c0_5, %c0_6] : memref<2x24x64xf32, #tpu.memory_space<vmem>>, vector<2x8x64xf32>
    tpu.vector_store %arg3[%c0_4, %c0_5, %c0_6], %3 {strides = array<i32>} : memref<2x24x64xf32, #tpu.memory_space<vmem>>, vector<2x8x64xf32>,
    %c0_7 = arith.constant 0 : index
    %c16 = arith.constant 16 : index
    %c0_8 = arith.constant 0 : index
    %5 = vector.load %arg3[%c0_7, %c16, %c0_8] : memref<2x24x64xf32, #tpu.memory_space<vmem>>, vector<2x8x64xf32>
    tpu.vector_store %arg3[%c0_7, %c16, %c0_8], %3 {strides = array<i32>} : memref<2x24x64xf32, #tpu.memory_space<vmem>>, vector<2x8x64xf32>,
    %6 = vector.shape_cast %2 : vector<16x64xf32> to vector<2x8x64xf32>
    %c0_9 = arith.constant 0 : index
    %c8 = arith.constant 8 : index
    %c0_10 = arith.constant 0 : index
    %7 = vector.load %arg3[%c0_9, %c8, %c0_10] : memref<2x24x64xf32, #tpu.memory_space<vmem>>, vector<2x8x64xf32>
    tpu.vector_store %arg3[%c0_9, %c8, %c0_10], %6 {strides = array<i32>} : memref<2x24x64xf32, #tpu.memory_space<vmem>>, vector<2x8x64xf32>,
    return
  }
  func.func @transform_0(%arg0: i32) -> (i32, i32) {
    %c0_i32 = arith.constant 0 : i32
    %c0_i32_0 = arith.constant 0 : i32
    return %arg0, %c0_i32 : i32, i32
  }
  func.func @transform_1(%arg0: i32) -> (i32, i32) {
    %c0_i32 = arith.constant 0 : i32
    %c0_i32_0 = arith.constant 0 : i32
    %c0_i32_1 = arith.constant 0 : i32
    return %c0_i32, %c0_i32_0 : i32, i32
  }
  func.func @transform_2(%arg0: i32) -> (i32, i32, i32) {
    %c0_i32 = arith.constant 0 : i32
    %c0_i32_0 = arith.constant 0 : i32
    %c0_i32_1 = arith.constant 0 : i32
    return %arg0, %c0_i32, %c0_i32_0 : i32, i32, i32
  }
}

</mosaic_0001>

<llo_original>
// kernel: tpu_custom_call.1
$region0: #{tpu_custom_call.1}
  #allocation0 [shape = 'u32[]', space=smem, size = 0x4, offset = 0x4, fixed_abs, tag = 'smem constant byte address 0x4 - core index']
  #allocation1 [shape = 'u32[72,128]{1,0:T(1,128)}', space=vmem, size = 0x9000, scoped, tag = 'internal scratch']
  %s0 = inlined_call_operand.vmem [shape: f32[32,256], index: 0, kind: input, shape index: {}]
  %s1 = inlined_call_operand.vmem [shape: f32[256,64], index: 1, kind: input, shape index: {}]
  %s2 = inlined_call_operand.hbm [shape: f32[4,24,64], index: 2, kind: output, shape index: {}]
  %s3 = sld [smem:[#allocation0]]
  $region41: #{tpu_custom_call.1} parent=0
    _
  %s5 = ssub.s32 1, %s3
  %s6 = scalar_select 0, %s5, %s3
  $region1: #{tpu_custom_call.1} parent=0
    #allocation2 [shape = 'u8[49152]{0}', space=vmem, size = 0xc000, scoped, tag = 'output window, operand 0']
    #allocation3 [shape = 's32[2]{0}', space=sflag, size = 0x8, scoped, tag = 'scoped memory for tpu_custom_call.1']
    %7 = vsyncpa [#allocation3], 0
    %s8 = scalar_lea.sflag [#allocation3], 1
    %9 = vsyncpa %s8, 0
    loop: start=0, step=1, limit=4
    $region2: #{tpu_custom_call.1} parent=1 // loop_pre_header
      _
    $region3: #{tpu_custom_call.1} parent=1 // loop_header
      %s11 = sphi 0, %s15
      %p12 = scmp.ge.s32.totalorder %s11, 4
      %s21 = sphi 0, %s23
      %s24 = sphi 0, %s21
      %s25 = sphi 0, %s24
      %s41 = sphi 0, %s25
      %s45 = sphi 0, %s45
      %s47 = sphi 0, %s45
      %s48 = sphi 0, %s47
      %s62 = sphi 0, %s48
      %s68 = sphi 0, %s70
      %s71 = sphi 0, %s68
      %s72 = sphi 0, %s71
      %s88 = sphi 0, %s72
    $region4: #{tpu_custom_call.1} parent=1 // loop_header_branch
      %14 = sbr.rel (%p12) target = $region8
    $region5: #{tpu_custom_call.1} parent=1 // loop_body
      %s16 = ssub.s32 %s11, 1
      %s17 = ssub.s32 %s11, 2
      %s18 = sadd.s32 %s11, 1
      %s19 = ssub.s32 %s11, %s18
      %p20 = scmp.eq.s32.totalorder %s19, 0
      %s22 = sadd.s32 %s21, 1
      %s23 = scalar_select %p20, %s21, %s22
      %p26 = pneg %p20
      %p27 = scmp.eq.s32.totalorder %s11, 1
      %p28 = por %p26, %p27
      %p29 = scmp.ne.s32.totalorder %s21, %s24
      %p30 = scmp.eq.s32.totalorder %s11, 0
      %p31 = por %p29, %p30
      %p32 = scmp.ne.s32.totalorder %s21, %s24
      %p33 = scmp.eq.s32.totalorder %s16, 1
      %p34 = por %p32, %p33
      %p35 = scmp.ne.s32.totalorder %s24, %s25
      %p36 = scmp.eq.s32.totalorder %s16, 0
      %p37 = por %p35, %p36
      %p38 = scmp.ne.s32.totalorder %s24, %s25
      %p39 = scmp.eq.s32.totalorder %s17, 1
      %p40 = por %p38, %p39
      %p42 = scmp.ne.s32.totalorder %s25, %s41
      %p43 = scmp.eq.s32.totalorder %s17, 0
      %p44 = por %p42, %p43
      %s46 = sadd.s32 %s45, 1
      %p49 = scmp.eq.s32.totalorder %s11, 1
      %p50 = scmp.ne.s32.totalorder %s45, %s47
      %p51 = scmp.eq.s32.totalorder %s11, 0
      %p52 = por %p50, %p51
      %p53 = scmp.ne.s32.totalorder %s45, %s47
      %p54 = scmp.eq.s32.totalorder %s16, 1
      %p55 = por %p53, %p54
      %p56 = scmp.ne.s32.totalorder %s47, %s48
      %p57 = scmp.eq.s32.totalorder %s16, 0
      %p58 = por %p56, %p57
      %p59 = scmp.ne.s32.totalorder %s47, %s48
      %p60 = scmp.eq.s32.totalorder %s17, 1
      %p61 = por %p59, %p60
      %p63 = scmp.ne.s32.totalorder %s48, %s62
      %p64 = scmp.eq.s32.totalorder %s17, 0
      %p65 = por %p63, %p64
      %s66 = ssub.s32 %s11, %s18
      %p67 = scmp.eq.s32.totalorder %s66, 0
      %s69 = sadd.s32 %s68, 1
      %s70 = scalar_select %p67, %s68, %s69
      %p73 = pneg %p67
      %p74 = scmp.eq.s32.totalorder %s11, 1
      %p75 = por %p73, %p74
      %p76 = scmp.ne.s32.totalorder %s68, %s71
      %p77 = scmp.eq.s32.totalorder %s11, 0
      %p78 = por %p76, %p77
      %p79 = scmp.ne.s32.totalorder %s68, %s71
      %p80 = scmp.eq.s32.totalorder %s16, 1
      %p81 = por %p79, %p80
      %p82 = scmp.ne.s32.totalorder %s71, %s72
      %p83 = scmp.eq.s32.totalorder %s16, 0
      %p84 = por %p82, %p83
      %p85 = scmp.ne.s32.totalorder %s71, %s72
      %p86 = scmp.eq.s32.totalorder %s17, 1
      %p87 = por %p85, %p86
      %p89 = scmp.ne.s32.totalorder %s72, %s88
      %p90 = scmp.eq.s32.totalorder %s17, 0
      %p91 = por %p89, %p90
      %p92 = scmp.le.s32.totalorder 1, %s11
      %p93 = scmp.lt.s32.totalorder %s11, 3
      %p94 = pnand %p92, %p93
      %p95 = pneg %p94
      // Predicated region
      $region9: #{tpu_custom_call.1} parent=5 // pred_check
        _
      $region10: #{tpu_custom_call.1} parent=5 // pred_check_branch
        %97 = sbr.rel (%p94) target = $region12
      $region11: #{tpu_custom_call.1} parent=5 // pred_region
        %s98 = ssub.s32 %s11, 1
        // Predicated region
        $region13: #{tpu_custom_call.1} parent=11 // pred_check
          %p99 = pneg %p58
        $region14: #{tpu_custom_call.1} parent=11 // pred_check_branch
          %101 = sbr.rel (%p99) target = $region16
        $region15: #{tpu_custom_call.1} parent=11 // pred_region
          _
        $region16: #{tpu_custom_call.1} parent=11 // pred_fallthru
          _
      $region12: #{tpu_custom_call.1} parent=5 // pred_fallthru
        _
      %p102 = scmp.lt.s32.totalorder %s11, 2
      // Predicated region
      $region17: #{tpu_custom_call.1} parent=5 // pred_check
        %p103 = pneg %p102
      $region18: #{tpu_custom_call.1} parent=5 // pred_check_branch
        %105 = sbr.rel (%p103) target = $region20
      $region19: #{tpu_custom_call.1} parent=5 // pred_region
        // Predicated region
        $region21: #{tpu_custom_call.1} parent=19 // pred_check
          %p106 = pneg %p31
        $region22: #{tpu_custom_call.1} parent=19 // pred_check_branch
          %108 = sbr.rel (%p106) target = $region24
        $region23: #{tpu_custom_call.1} parent=19 // pred_region
          %s109 = smul.u32 2, %s11
          %p110 = scmp.lt.s32.totalorder %s109, 3
          %s111 = scalar_select %p110, %s109, 3
          %s112 = smul.addr %s111, 2
          %s113 = smul.addr %s112, 8
          %s114 = scalar_lea.vmem %s0, %s113
          %s115 = smul.u32 2, %s11
        $region24: #{tpu_custom_call.1} parent=19 // pred_fallthru
          _
      $region20: #{tpu_custom_call.1} parent=5 // pred_fallthru
        _
      %p116 = scmp.le.s32.totalorder 1, %s11
      %p117 = scmp.lt.s32.totalorder %s11, 3
      %p118 = pnand %p116, %p117
      %p119 = pneg %p118
      // Predicated region
      $region25: #{tpu_custom_call.1} parent=5 // pred_check
        _
      $region26: #{tpu_custom_call.1} parent=5 // pred_check_branch
        %121 = sbr.rel (%p118) target = $region28
      $region27: #{tpu_custom_call.1} parent=5 // pred_region
        %s122 = ssub.s32 %s11, 1
        %s123 = smul.u32 2, %s16
        %p124 = scmp.lt.s32.totalorder %s123, 3
        %s125 = scalar_select %p124, %s123, 3
        %s126 = smul.addr %s125, 2
        %s127 = smul.addr %s126, 8
        %s128 = scalar_lea.vmem %s0, %s127
        %p129 = pneg %p37
        %p130 = pneg %p34
        %p131 = pneg %p58
        %p132 = pneg %p55
        %p133 = pneg %p84
        %p134 = pneg %p81
        %s135 = sand.u32 %s71, 1
        %s136 = scalar_lea.sflag [#allocation3], %s135
        %s137 = sand.u32 %s71, 1
        %s138 = smul.addr %s137, 48
        %s139 = scalar_lea.vmem [#allocation2], %s138
        %s140 = smul.u32 2, %s16
        %p141 = scmp.lt.s32.totalorder %s140, 3
        %s142 = scalar_select %p141, %s140, 3
        %s143 = smul.addr %s142, 2
        %s144 = smul.addr %s143, 8
        %s145 = scalar_lea.vmem %s0, %s144
        %s146 = smul.u32 2, %s16
        %s147 = smul.u32 2, %s16
        %v148 = vld [vmem:[%s145] sm:$0xff]
        %v149 = vld [vmem:[%s145 + $0x8] sm:$0xff]
        %v150 = vld [vmem:[%s145 + $0x10] sm:$0xff]
        %v151 = vld [vmem:[%s145 + $0x18] sm:$0xff]
        %v152 = vld [vmem:[%s1] sm:$0xff]
        %v153 = vld [vmem:[%s1 + $0x8] sm:$0xff]
        %v154 = vld [vmem:[%s1 + $0x10] sm:$0xff]
        %v155 = vld [vmem:[%s1 + $0x18] sm:$0xff]
        %v156 = vld [vmem:[%s1 + $0x20] sm:$0xff]
        %v157 = vld [vmem:[%s1 + $0x28] sm:$0xff]
        %v158 = vld [vmem:[%s1 + $0x30] sm:$0xff]
        %v159 = vld [vmem:[%s1 + $0x38] sm:$0xff]
        %v160 = vld [vmem:[%s1 + $0x40] sm:$0xff]
        %v161 = vld [vmem:[%s1 + $0x48] sm:$0xff]
        %v162 = vld [vmem:[%s1 + $0x50] sm:$0xff]
        %v163 = vld [vmem:[%s1 + $0x58] sm:$0xff]
        %v164 = vld [vmem:[%s1 + $0x60] sm:$0xff]
        %v165 = vld [vmem:[%s1 + $0x68] sm:$0xff]
        %v166 = vld [vmem:[%s1 + $0x70] sm:$0xff]
        %v167 = vld [vmem:[%s1 + $0x78] sm:$0xff]
        %v168 = vld [vmem:[%s1 + $0x80] sm:$0xff]
        %v169 = vld [vmem:[%s1 + $0x88] sm:$0xff]
        %v170 = vld [vmem:[%s1 + $0x90] sm:$0xff]
        %v171 = vld [vmem:[%s1 + $0x98] sm:$0xff]
        %v172 = vld [vmem:[%s1 + $0xa0] sm:$0xff]
        %v173 = vld [vmem:[%s1 + $0xa8] sm:$0xff]
        %v174 = vld [vmem:[%s1 + $0xb0] sm:$0xff]
        %v175 = vld [vmem:[%s1 + $0xb8] sm:$0xff]
        %v176 = vld [vmem:[%s1 + $0xc0] sm:$0xff]
        %v177 = vld [vmem:[%s1 + $0xc8] sm:$0xff]
        %v178 = vld [vmem:[%s1 + $0xd0] sm:$0xff]
        %v179 = vld [vmem:[%s1 + $0xd8] sm:$0xff]
        %v180 = vld [vmem:[%s1 + $0xe0] sm:$0xff]
        %v181 = vld [vmem:[%s1 + $0xe8] sm:$0xff]
        %v182 = vld [vmem:[%s1 + $0xf0] sm:$0xff]
        %v183 = vld [vmem:[%s1 + $0xf8] sm:$0xff]
        %184 = vmatpush.msra.mxu0 %v167
        %185 = vmatpush.msra.mxu0 %v166
        %186 = vmatpush.msra.mxu0 %v165
        %187 = vmatpush.msra.mxu0 %v164
        %188 = vmatpush.msra.mxu0 %v163
        %189 = vmatpush.msra.mxu0 %v162
        %190 = vmatpush.msra.mxu0 %v161
        %191 = vmatpush.msra.mxu0 %v160
        %192 = vmatpush.msra.mxu0 %v159
        %193 = vmatpush.msra.mxu0 %v158
        %194 = vmatpush.msra.mxu0 %v157
        %195 = vmatpush.msra.mxu0 %v156
        %196 = vmatpush.msra.mxu0 %v155
        %197 = vmatpush.msra.mxu0 %v154
        %198 = vmatpush.msra.mxu0 %v153
        %199 = vmatpush.msra.mxu0 %v152
        %200 = vmatmul.f32.gmra.mxu0 %v148
        %v201 = vpop.f32.mrf.mxu0
        %v202 = vadd.f32 0.0, %v201
        %203 = vmatmul.f32.gmra.mxu0 %v150
        %v204 = vpop.f32.mrf.mxu0
        %v205 = vadd.f32 0.0, %v204
        %206 = vdwg.mxu0
        %207 = vmatpush.msra.mxu0 %v183
        %208 = vmatpush.msra.mxu0 %v182
        %209 = vmatpush.msra.mxu0 %v181
        %210 = vmatpush.msra.mxu0 %v180
        %211 = vmatpush.msra.mxu0 %v179
        %212 = vmatpush.msra.mxu0 %v178
        %213 = vmatpush.msra.mxu0 %v177
        %214 = vmatpush.msra.mxu0 %v176
        %215 = vmatpush.msra.mxu0 %v175
        %216 = vmatpush.msra.mxu0 %v174
        %217 = vmatpush.msra.mxu0 %v173
        %218 = vmatpush.msra.mxu0 %v172
        %219 = vmatpush.msra.mxu0 %v171
        %220 = vmatpush.msra.mxu0 %v170
        %221 = vmatpush.msra.mxu0 %v169
        %222 = vmatpush.msra.mxu0 %v168
        %223 = vmatmul.f32.gmra.mxu0 %v149
        %v224 = vpop.f32.mrf.mxu0
        %v225 = vadd.f32 %v202, %v224
        %226 = vmatmul.f32.gmra.mxu0 %v151
        %v227 = vpop.f32.mrf.mxu0
        %v228 = vadd.f32 %v205, %v227
        %229 = vdwg.mxu0
        %vm230 = vcmask 523264
        %231 = vst.msk [vmem:[%s139] sm:$0xff] %vm230, 0.0
        %232 = vst.msk [vmem:[%s139 + $0x18] sm:$0xff] %vm230, 0.0
        %233 = vst.msk [vmem:[%s139 + $0x10] sm:$0xff] %vm230, 0.0
        %234 = vst.msk [vmem:[%s139 + $0x28] sm:$0xff] %vm230, 0.0
        %235 = vst.msk [vmem:[%s139 + $0x8] sm:$0xff] %vm230, %v225
        %236 = vst.msk [vmem:[%s139 + $0x20] sm:$0xff] %vm230, %v228
        %s237 = sand.u32 %s71, 1
        %s238 = scalar_lea.sflag [#allocation3], %s237
        %s239 = sand.u32 %s71, 1
        %s240 = smul.addr %s239, 48
        %s241 = scalar_lea.vmem [#allocation2], %s240
        // Predicated region
        $region29: #{tpu_custom_call.1} parent=27 // pred_check
          %p242 = pneg %p81
        $region30: #{tpu_custom_call.1} parent=27 // pred_check_branch
          %244 = sbr.rel (%p242) target = $region32
        $region31: #{tpu_custom_call.1} parent=27 // pred_region
          %s245 = smul.u32 2, %s16
          %247 = vsyncadd %s238, 0
          %s248 = smul.addr %s245, 3
          %s249 = smul.addr %s248, 8
          %s250 = scalar_lea.hbm %s2, %s249
          %s251 = sshll.u32 %s241, 4
          %s252 = int_to_ptr.vmem [resolvable:$true] %s251
          %s253 = sshll.u32 %s250, 4
          %s254 = int_to_ptr.hbm [resolvable:$true] %s253
          %259 = dma.vmem_to_hbm [thread:$0]  %s252, 768, %s254, %s238, 128, 128, 8
        $region32: #{tpu_custom_call.1} parent=27 // pred_fallthru
          _
      $region28: #{tpu_custom_call.1} parent=5 // pred_fallthru
        _
      %p260 = scmp.le.s32.totalorder 2, %s11
      // Predicated region
      $region33: #{tpu_custom_call.1} parent=5 // pred_check
        %p261 = pneg %p260
      $region34: #{tpu_custom_call.1} parent=5 // pred_check_branch
        %263 = sbr.rel (%p261) target = $region36
      $region35: #{tpu_custom_call.1} parent=5 // pred_region
        %s264 = ssub.s32 %s11, 2
        // Predicated region
        $region37: #{tpu_custom_call.1} parent=35 // pred_check
          %p265 = pneg %p87
        $region38: #{tpu_custom_call.1} parent=35 // pred_check_branch
          %267 = sbr.rel (%p265) target = $region40
        $region39: #{tpu_custom_call.1} parent=35 // pred_region
          %s268 = sand.u32 %s72, 1
          %s269 = scalar_lea.sflag [#allocation3], %s268
          %s270 = sand.u32 %s72, 1
          %s271 = smul.addr %s270, 48
          %s272 = scalar_lea.vmem [#allocation2], %s271
          %274 = dma.done %s269, 768
        $region40: #{tpu_custom_call.1} parent=35 // pred_fallthru
          _
      $region36: #{tpu_custom_call.1} parent=5 // pred_fallthru
        _
    $region6: #{tpu_custom_call.1} parent=1 // loop_footer
      %s15 = sadd.s32 1, %s11
    $region7: #{tpu_custom_call.1} parent=1 // loop_footer_branch
      %10 = sbr.rel target = $region3
    $region8: #{tpu_custom_call.1} parent=1 // loop_exit
      _
    %275 = vsyncpa [#allocation3], 1
    %s276 = scalar_lea.sflag [#allocation3], 1
    %277 = vsyncpa %s276, 1

</llo_original>
